<compile_context>
chip_gen: v7x
topology: tpu7x:2x2x1
jax: 0.10.0
libtpu: 0.0.40
codegen_flags: <defaults>
</compile_context>

<pallas_src>
import jax
import jax.numpy as jnp
from jax.experimental import pallas as pl
from jax.experimental.pallas import tpu as pltpu

_MIB = 1024 * 1024


def _shuffle_kernel(x_ref, o_ref):
    # x_ref: (bb, gc, kc, HW)  ->  o_ref: (bb, kc, gc, HW)
    # Pure swap of two non-lane axes; the lane axis (HW) is untouched, so this
    # lowers to sublane reorders plus full-lane-width stores.
    o_ref[...] = jnp.transpose(x_ref[...], (0, 2, 1, 3))


def _vmem_budget():
    """Return (scoped vmem_limit_bytes, per-step block byte budget)."""
    try:
        phys = getattr(pltpu.get_tpu_info(), "vmem_capacity_bytes", None)
    except Exception:
        phys = None
    if phys is None:
        phys = 64 * _MIB                 # conservative default (v7x per-TC)
    if phys >= 96 * _MIB:                # v5e / v6e: 128 MiB physical VMEM
        return 64 * _MIB, 8 * _MIB
    return 40 * _MIB, 6 * _MIB           # v7x: 64 MiB per TensorCore


def _plan_blocks(B, g, cpg, hw, itemsize, block_budget):
    """Pick (bb, chunk_axis, chunk) with (8,128)-legal blocks near the budget.

    chunk_axis is "cpg" (chunk the channels-per-group axis) or "g" (chunk the
    group axis); every returned chunk either equals the full axis extent or is
    a multiple of the dtype's sublane packing, so no BlockSpec is illegal.
    """
    sub = max(1, 32 // itemsize)          # 8 for f32, 16 for bf16, 32 for int8
    per_sample = g * cpg * hw * itemsize

    def legal_chunks(extent):
        c = [extent]
        c += [d for d in range(sub, extent, sub) if extent % d == 0]
        return sorted(set(c))

    if per_sample <= block_budget:
        # Merge whole samples per grid step.
        bb = 1
        for cand in range(B, 0, -1):
            if B % cand == 0 and cand * per_sample <= block_budget:
                bb = cand
                break
        # Keep >= 2 grid steps when B allows it (v7x dual-TC sharding).
        if B >= 2 and B // bb < 2:
            bb = max(d for d in range(1, B // 2 + 1) if B % d == 0)
        chunk = cpg
        # Single-sample, single-chunk grids can't shard across TCs: split cpg
        # once if that stays sublane-legal.
        if B // bb == 1 and cpg % (2 * sub) == 0:
            chunk = cpg // 2
        return bb, "cpg", chunk

    # Per-sample slab exceeds the budget: bb = 1, chunk a channel axis.
    fits_c = [c for c in legal_chunks(cpg) if g * c * hw * itemsize <= block_budget]
    if fits_c:
        return 1, "cpg", max(fits_c)
    fits_g = [c for c in legal_chunks(g) if c * cpg * hw * itemsize <= block_budget]
    if fits_g:
        return 1, "g", max(fits_g)
    # Nothing legal fits: take the smallest legal block on either axis; the
    # caller raises vmem_limit_bytes to cover 4x this block.
    best_c = min(legal_chunks(cpg))
    best_g = min(legal_chunks(g))
    if g * best_c <= best_g * cpg:
        return 1, "cpg", best_c
    return 1, "g", best_g


def channel_shuffle(x, num_groups, *, xla_below_hw=None):
    """Pallas TPU implementation of ShuffleNetV1 ChannelShuffle.forward (NCHW).

    xla_below_hw: optional int; spatial sizes with H*W below this threshold
    (e.g. 128) are routed to XLA's native reshape/transpose, which already
    hits the HBM roofline when lane utilization would be poor.
    """
    B, C, H, W = x.shape
    g = num_groups
    assert C % g == 0, "channels must be divisible by num_groups"
    cpg = C // g
    hw = H * W

    if xla_below_hw is not None and hw < xla_below_hw:
        return channel_shuffle_ref(x, num_groups)

    itemsize = x.dtype.itemsize
    base_limit, block_budget = _vmem_budget()
    bb, axis, chunk = _plan_blocks(B, g, cpg, hw, itemsize, block_budget)

    x4 = x.reshape(B, g, cpg, hw)         # free view of contiguous NCHW

    if axis == "cpg":
        n_chunks = cpg // chunk
        in_spec = pl.BlockSpec((bb, g, chunk, hw), lambda b, k: (b, 0, k, 0))
        out_spec = pl.BlockSpec((bb, chunk, g, hw), lambda b, k: (b, k, 0, 0))
        block_bytes = bb * g * chunk * hw * itemsize
    else:  # chunk the group axis instead (cpg had no legal fitting divisor)
        n_chunks = g // chunk
        in_spec = pl.BlockSpec((bb, chunk, cpg, hw), lambda b, k: (b, k, 0, 0))
        out_spec = pl.BlockSpec((bb, cpg, chunk, hw), lambda b, k: (b, 0, k, 0))
        block_bytes = bb * chunk * cpg * hw * itemsize

    # 2 double-buffered inputs + 2 double-buffered outputs = 4x block, + margin.
    vmem_limit = int(max(base_limit, 4 * block_bytes + 2 * _MIB))

    out4 = pl.pallas_call(
        _shuffle_kernel,
        out_shape=jax.ShapeDtypeStruct((B, cpg, g, hw), x.dtype),
        grid=(B // bb, n_chunks),
        in_specs=[in_spec],
        out_specs=out_spec,
        compiler_params=pltpu.CompilerParams(
            dimension_semantics=("parallel", "parallel"),
            vmem_limit_bytes=vmem_limit,
        ),
    )(x4)

    # Free view: out4[b, k, j, :] lands at output channel k*g + j, exactly the
    # PyTorch view/permute/flatten result.
    return out4.reshape(B, C, H, W)


def channel_shuffle_ref(x, num_groups):
    """Pure-JAX reference mirroring the PyTorch forward exactly."""
    B, C, H, W = x.shape
    x = x.reshape(B, num_groups, C // num_groups, H, W)
    x = jnp.transpose(x, (0, 2, 1, 3, 4))
    return x.reshape(B, C, H, W)


if __name__ == "__main__":
    key = jax.random.PRNGKey(0)

    tests = [
        # (B, C, H, W, groups)
        (2, 8, 16, 16, 4),   # bb = 1, full-cpg block (original proven config)
        (4, 16, 16, 16, 2),  # bb = 2 per grid step (exercises batch merging)
    ]
    for (B, C, H, W, gg) in tests:
        x = jax.random.normal(key, (B, C, H, W), dtype=jnp.float32)
        out = jax.block_until_ready(channel_shuffle(x, gg))
        ref = channel_shuffle_ref(x, gg)
        assert out.shape == ref.shape and out.dtype == ref.dtype
        assert bool(jnp.array_equal(out, ref)), f"mismatch for {(B, C, H, W, gg)}"

    print("KERNEL_OK")
</pallas_src>

<mosaic_0001>
module attributes {stable_mosaic.version = 11 : i64} {
  func.func @_shuffle_kernel(%arg0: i32, %arg1: i32, %arg2: memref<1x4x2x256xf32, #tpu.memory_space<vmem>>, %arg3: memref<1x2x4x256xf32, #tpu.memory_space<vmem>>) attributes {dimension_semantics = [#tpu.dimension_semantics<parallel>, #tpu.dimension_semantics<parallel>], iteration_bounds = array<i64: 2, 1>, scalar_prefetch = 0 : i64, scratch_operands = 0 : i64, tpu.core_type = #tpu.core_type<tc>, window_params = [{transform_indices = @transform_0, window_bounds = array<i64: 1, 4, 2, 256>}, {transform_indices = @transform_1, window_bounds = array<i64: 1, 2, 4, 256>}]} {
    %c0 = arith.constant 0 : index
    %c0_0 = arith.constant 0 : index
    %c0_1 = arith.constant 0 : index
    %c0_2 = arith.constant 0 : index
    %0 = vector.load %arg2[%c0, %c0_0, %c0_1, %c0_2] : memref<1x4x2x256xf32, #tpu.memory_space<vmem>>, vector<1x4x2x256xf32>
    %1 = tpu.transpose %0, [0, 2, 1, 3] : vector<1x4x2x256xf32> -> vector<1x2x4x256xf32>
    %c0_3 = arith.constant 0 : index
    %c0_4 = arith.constant 0 : index
    %c0_5 = arith.constant 0 : index
    %c0_6 = arith.constant 0 : index
    %2 = vector.load %arg3[%c0_3, %c0_4, %c0_5, %c0_6] : memref<1x2x4x256xf32, #tpu.memory_space<vmem>>, vector<1x2x4x256xf32>
    tpu.vector_store %arg3[%c0_3, %c0_4, %c0_5, %c0_6], %1 {strides = array<i32>} : memref<1x2x4x256xf32, #tpu.memory_space<vmem>>, vector<1x2x4x256xf32>,
    return
  }
  func.func @transform_0(%arg0: i32, %arg1: i32) -> (i32, i32, i32, i32) {
    %c0_i32 = arith.constant 0 : i32
    %c0_i32_0 = arith.constant 0 : i32
    %c0_i32_1 = arith.constant 0 : i32
    return %arg0, %c0_i32, %arg1, %c0_i32_0 : i32, i32, i32, i32
  }
  func.func @transform_1(%arg0: i32, %arg1: i32) -> (i32, i32, i32, i32) {
    %c0_i32 = arith.constant 0 : i32
    %c0_i32_0 = arith.constant 0 : i32
    %c0_i32_1 = arith.constant 0 : i32
    return %arg0, %arg1, %c0_i32, %c0_i32_0 : i32, i32, i32, i32
  }
}

</mosaic_0001>

<llo_original>
// kernel: tpu_custom_call.1
$region0: #{tpu_custom_call.1}
  #allocation0 [shape = 'u32[]', space=smem, size = 0x4, offset = 0x4, fixed_abs, tag = 'smem constant byte address 0x4 - core index']
  #allocation1 [shape = 'u32[144,128]{1,0:T(1,128)}', space=vmem, size = 0x12000, scoped, tag = 'internal scratch']
  %s0 = inlined_call_operand.hbm [shape: f32[2,4,2,256], index: 0, kind: input, shape index: {}]
  %s1 = inlined_call_operand.hbm [shape: f32[2,2,4,256], index: 1, kind: output, shape index: {}]
  %s2 = sld [smem:[#allocation0]]
  $region41: #{tpu_custom_call.1} parent=0
    _
  %s4 = ssub.s32 1, %s2
  %s5 = scalar_select 0, %s4, %s2
  $region1: #{tpu_custom_call.1} parent=0
    #allocation2 [shape = 'u8[16384]{0}', space=vmem, size = 0x4000, scoped, tag = 'input window, operand 0']
    #allocation3 [shape = 's32[2]{0}', space=sflag, size = 0x8, scoped, tag = 'scoped memory for tpu_custom_call.1']
    #allocation4 [shape = 's32[2]{0}', space=sflag, size = 0x8, scoped, tag = 'scoped memory for tpu_custom_call.1']
    #allocation5 [shape = 'u8[16384]{0}', space=vmem, size = 0x4000, scoped, tag = 'output window, operand 0']
    %6 = vsyncpa [#allocation3], 0
    %s7 = scalar_lea.sflag [#allocation3], 1
    %8 = vsyncpa %s7, 0
    %9 = vsyncpa [#allocation4], 0
    %s10 = scalar_lea.sflag [#allocation4], 1
    %11 = vsyncpa %s10, 0
    loop: start=0, step=1, limit=4
    $region2: #{tpu_custom_call.1} parent=1 // loop_pre_header
      _
    $region3: #{tpu_custom_call.1} parent=1 // loop_header
      %s13 = sphi 0, %s17
      %p14 = scmp.ge.s32.totalorder %s13, 4
      %s20 = sphi 0, %s32
      %s21 = sphi 0, %s28
      %s22 = sphi 0, %s20
      %s23 = sphi 0, %s21
      %s24 = sphi 0, %s22
      %s25 = sphi 0, %s23
      %s37 = sphi 0, %s39
      %s40 = sphi 0, %s37
      %s41 = sphi 0, %s40
      %s57 = sphi 0, %s41
      %s65 = sphi 0, %s67
      %s68 = sphi 0, %s65
      %s69 = sphi 0, %s68
      %s85 = sphi 0, %s69
    $region4: #{tpu_custom_call.1} parent=1 // loop_header_branch
      %16 = sbr.rel (%p14) target = $region8
    $region5: #{tpu_custom_call.1} parent=1 // loop_body
      %s18 = ssub.s32 %s13, 1
      %s19 = ssub.s32 %s13, 2
      %s26 = sadd.s32 1, %s21
      %p27 = scmp.ge.s32.totalorder %s26, 1
      %s28 = scalar_select %p27, 0, %s26
      %s29 = sadd.s32 1, %s20
      %s30 = scalar_select %p27, %s29, %s20
      %p31 = scmp.ge.s32.totalorder %s30, 2
      %s32 = scalar_select %p31, 0, %s30
      %s33 = ssub.s32 %s20, %s32
      %s34 = ssub.s32 %s21, %s28
      %s35 = sor.u32 %s33, %s34
      %p36 = scmp.eq.s32.totalorder %s35, 0
      %s38 = sadd.s32 %s37, 1
      %s39 = scalar_select %p36, %s37, %s38
      %p42 = pneg %p36
      %p43 = scmp.eq.s32.totalorder %s13, 1
      %p44 = por %p42, %p43
      %p45 = scmp.ne.s32.totalorder %s37, %s40
      %p46 = scmp.eq.s32.totalorder %s13, 0
      %p47 = por %p45, %p46
      %p48 = scmp.ne.s32.totalorder %s37, %s40
      %p49 = scmp.eq.s32.totalorder %s18, 1
      %p50 = por %p48, %p49
      %p51 = scmp.ne.s32.totalorder %s40, %s41
      %p52 = scmp.eq.s32.totalorder %s18, 0
      %p53 = por %p51, %p52
      %p54 = scmp.ne.s32.totalorder %s40, %s41
      %p55 = scmp.eq.s32.totalorder %s19, 1
      %p56 = por %p54, %p55
      %p58 = scmp.ne.s32.totalorder %s41, %s57
      %p59 = scmp.eq.s32.totalorder %s19, 0
      %p60 = por %p58, %p59
      %s61 = ssub.s32 %s20, %s32
      %s62 = ssub.s32 %s21, %s28
      %s63 = sor.u32 %s61, %s62
      %p64 = scmp.eq.s32.totalorder %s63, 0
      %s66 = sadd.s32 %s65, 1
      %s67 = scalar_select %p64, %s65, %s66
      %p70 = pneg %p64
      %p71 = scmp.eq.s32.totalorder %s13, 1
      %p72 = por %p70, %p71
      %p73 = scmp.ne.s32.totalorder %s65, %s68
      %p74 = scmp.eq.s32.totalorder %s13, 0
      %p75 = por %p73, %p74
      %p76 = scmp.ne.s32.totalorder %s65, %s68
      %p77 = scmp.eq.s32.totalorder %s18, 1
      %p78 = por %p76, %p77
      %p79 = scmp.ne.s32.totalorder %s68, %s69
      %p80 = scmp.eq.s32.totalorder %s18, 0
      %p81 = por %p79, %p80
      %p82 = scmp.ne.s32.totalorder %s68, %s69
      %p83 = scmp.eq.s32.totalorder %s19, 1
      %p84 = por %p82, %p83
      %p86 = scmp.ne.s32.totalorder %s69, %s85
      %p87 = scmp.eq.s32.totalorder %s19, 0
      %p88 = por %p86, %p87
      %p89 = scmp.le.s32.totalorder 1, %s13
      %p90 = scmp.lt.s32.totalorder %s13, 3
      %p91 = pnand %p89, %p90
      %p92 = pneg %p91
      // Predicated region
      $region9: #{tpu_custom_call.1} parent=5 // pred_check
        _
      $region10: #{tpu_custom_call.1} parent=5 // pred_check_branch
        %94 = sbr.rel (%p91) target = $region12
      $region11: #{tpu_custom_call.1} parent=5 // pred_region
        %s95 = ssub.s32 %s13, 1
      $region12: #{tpu_custom_call.1} parent=5 // pred_fallthru
        _
      %p96 = scmp.lt.s32.totalorder %s13, 2
      // Predicated region
      $region13: #{tpu_custom_call.1} parent=5 // pred_check
        %p97 = pneg %p96
      $region14: #{tpu_custom_call.1} parent=5 // pred_check_branch
        %99 = sbr.rel (%p97) target = $region16
      $region15: #{tpu_custom_call.1} parent=5 // pred_region
        // Predicated region
        $region17: #{tpu_custom_call.1} parent=15 // pred_check
          %p100 = pneg %p47
        $region18: #{tpu_custom_call.1} parent=15 // pred_check_branch
          %102 = sbr.rel (%p100) target = $region20
        $region19: #{tpu_custom_call.1} parent=15 // pred_region
          %s103 = sand.u32 %s37, 1
          %s104 = scalar_lea.sflag [#allocation3], %s103
          %s105 = sand.u32 %s37, 1
          %s106 = smul.addr %s105, 16
          %s107 = scalar_lea.vmem [#allocation2], %s106
          %s109 = ssub.s32 256, 256
          %110 = vsyncadd %s104, %s109
          %s111 = smul.addr %s21, 2
          %s112 = smul.addr %s20, 8
          %s113 = sadd.s32 %s111, %s112
          %s114 = smul.addr %s113, 32
          %s115 = scalar_lea.hbm %s0, %s114
          %s116 = sshll.u32 %s107, 4
          %s117 = int_to_ptr.vmem [resolvable:$true] %s116
          %122 = dma.hbm_to_vmem [thread:$0]  %s115, 256, %s117, %s104, 64, 64, 4
        $region20: #{tpu_custom_call.1} parent=15 // pred_fallthru
          _
      $region16: #{tpu_custom_call.1} parent=5 // pred_fallthru
        _
      %p123 = scmp.le.s32.totalorder 1, %s13
      %p124 = scmp.lt.s32.totalorder %s13, 3
      %p125 = pnand %p123, %p124
      %p126 = pneg %p125
      // Predicated region
      $region21: #{tpu_custom_call.1} parent=5 // pred_check
        _
      $region22: #{tpu_custom_call.1} parent=5 // pred_check_branch
        %128 = sbr.rel (%p125) target = $region24
      $region23: #{tpu_custom_call.1} parent=5 // pred_region
        %s129 = ssub.s32 %s13, 1
        %s130 = sand.u32 %s40, 1
        %s131 = scalar_lea.sflag [#allocation3], %s130
        %s132 = sand.u32 %s40, 1
        %s133 = smul.addr %s132, 16
        %s134 = scalar_lea.vmem [#allocation2], %s133
        // Predicated region
        $region25: #{tpu_custom_call.1} parent=23 // pred_check
          %p135 = pneg %p53
        $region26: #{tpu_custom_call.1} parent=23 // pred_check_branch
          %137 = sbr.rel (%p135) target = $region28
        $region27: #{tpu_custom_call.1} parent=23 // pred_region
          %138 = dma.done %s131, 256
        $region28: #{tpu_custom_call.1} parent=23 // pred_fallthru
          _
        %s139 = sand.u32 %s40, 1
        %s140 = scalar_lea.sflag [#allocation3], %s139
        %s141 = sand.u32 %s40, 1
        %s142 = smul.addr %s141, 16
        %s143 = scalar_lea.vmem [#allocation2], %s142
        %p144 = pneg %p53
        %p145 = pneg %p50
        %p146 = pneg %p81
        %p147 = pneg %p78
        %s148 = sand.u32 %s68, 1
        %s149 = scalar_lea.sflag [#allocation4], %s148
        %s150 = sand.u32 %s68, 1
        %s151 = smul.addr %s150, 16
        %s152 = scalar_lea.vmem [#allocation5], %s151
        %s153 = smul.u32 2, %s23
        %v154 = vld [vmem:[%s134] sm:$0xf]
        %v155 = vld [vmem:[%s134 + $0x4] sm:$0xf]
        %v156 = vld [vmem:[%s134 + $0x8] sm:$0xf]
        %v157 = vld [vmem:[%s134 + $0xc] sm:$0xf]
        %v158 = vcombine.low %v154, %v155
        %v160 = vunpack.c.l.s4 1934713408
        %v161 = vunpack.c.0.s8 %v160
        %v162 = vlaneseq
        %v163 = vshrl.u32 %v162, 7
        %v164 = vsub.s32 %v161, %v163
        %v165 = vrot.slane %v158, %v164
        %v166 = vcombine.high %v165, 0.0
        %v167 = vcombine.low %v156, %v157
        %v169 = vunpack.c.l.s4 1934713408
        %v170 = vunpack.c.0.s8 %v169
        %v171 = vlaneseq
        %v172 = vshrl.u32 %v171, 7
        %v173 = vsub.s32 %v170, %v172
        %v174 = vrot.slane %v167, %v173
        %v175 = vcombine.high %v174, 0.0
        %v180 = vcombine.low %v165, %v174
        %v182 = vunpack.c.l.s4 1983009808
        %v183 = vunpack.c.0.s8 %v182
        %v184 = vlaneseq
        %v185 = vshrl.u32 %v184, 7
        %v186 = vsub.s32 %v183, %v185
        %v187 = vrot.slane %v180, %v186
        %v188 = vcombine.low %v166, %v175
        %v190 = vunpack.c.l.s4 1983009808
        %v191 = vunpack.c.0.s8 %v190
        %v192 = vlaneseq
        %v193 = vshrl.u32 %v192, 7
        %v194 = vsub.s32 %v191, %v193
        %v195 = vrot.slane %v188, %v194
        %198 = vst [vmem:[%s152] sm:$0xff] %v187
        %199 = vst [vmem:[%s152 + $0x8] sm:$0xff] %v195
        %s200 = sand.u32 %s68, 1
        %s201 = scalar_lea.sflag [#allocation4], %s200
        %s202 = sand.u32 %s68, 1
        %s203 = smul.addr %s202, 16
        %s204 = scalar_lea.vmem [#allocation5], %s203
        // Predicated region
        $region29: #{tpu_custom_call.1} parent=23 // pred_check
          %p205 = pneg %p78
        $region30: #{tpu_custom_call.1} parent=23 // pred_check_branch
          %207 = sbr.rel (%p205) target = $region32
        $region31: #{tpu_custom_call.1} parent=23 // pred_region
          %s208 = smul.u32 2, %s23
          %s210 = ssub.s32 256, 256
          %211 = vsyncadd %s201, %s210
          %s212 = smul.addr %s208, 2
          %s213 = smul.addr %s22, 4
          %s214 = sadd.s32 %s212, %s213
          %s215 = smul.addr %s214, 64
          %s216 = scalar_lea.hbm %s1, %s215
          %s217 = sshll.u32 %s204, 4
          %s218 = int_to_ptr.vmem [resolvable:$true] %s217
          %223 = dma.vmem_to_hbm [thread:$0]  %s218, 256, %s216, %s201, 128, 128, 8
        $region32: #{tpu_custom_call.1} parent=23 // pred_fallthru
          _
      $region24: #{tpu_custom_call.1} parent=5 // pred_fallthru
        _
      %p224 = scmp.le.s32.totalorder 2, %s13
      // Predicated region
      $region33: #{tpu_custom_call.1} parent=5 // pred_check
        %p225 = pneg %p224
      $region34: #{tpu_custom_call.1} parent=5 // pred_check_branch
        %227 = sbr.rel (%p225) target = $region36
      $region35: #{tpu_custom_call.1} parent=5 // pred_region
        %s228 = ssub.s32 %s13, 2
        // Predicated region
        $region37: #{tpu_custom_call.1} parent=35 // pred_check
          %p229 = pneg %p84
        $region38: #{tpu_custom_call.1} parent=35 // pred_check_branch
          %231 = sbr.rel (%p229) target = $region40
        $region39: #{tpu_custom_call.1} parent=35 // pred_region
          %s232 = sand.u32 %s69, 1
          %s233 = scalar_lea.sflag [#allocation4], %s232
          %s234 = sand.u32 %s69, 1
          %s235 = smul.addr %s234, 16
          %s236 = scalar_lea.vmem [#allocation5], %s235
          %237 = dma.done %s233, 256
        $region40: #{tpu_custom_call.1} parent=35 // pred_fallthru
          _
      $region36: #{tpu_custom_call.1} parent=5 // pred_fallthru
        _
    $region6: #{tpu_custom_call.1} parent=1 // loop_footer
      %s17 = sadd.s32 1, %s13
    $region7: #{tpu_custom_call.1} parent=1 // loop_footer_branch
      %12 = sbr.rel target = $region3
    $region8: #{tpu_custom_call.1} parent=1 // loop_exit
      _
    %238 = vsyncpa [#allocation3], 1
    %s239 = scalar_lea.sflag [#allocation3], 1
    %240 = vsyncpa %s239, 1
    %241 = vsyncpa [#allocation4], 1
    %s242 = scalar_lea.sflag [#allocation4], 1
    %243 = vsyncpa %s242, 1

</llo_original>
